<compile_context>
chip_gen: v5e
topology: v5e:2x2
jax: 0.10.0
libtpu: 0.0.40
codegen_flags: <defaults>
</compile_context>

<pallas_src>
import functools

import jax
import jax.numpy as jnp
from jax import lax
from jax.experimental import pallas as pl
from jax.experimental.pallas import tpu as pltpu


def _self_attention_kernel(x_ref, mask_ref, wqkv_ref, o_ref, *, num_head, d_model):
    # x_ref    : (1, d, L)   current batch, channel-first, f32
    # mask_ref : (1, 1, L)   current batch mask (1 valid / 0 pad), f32
    # wqkv_ref : (3d, d)     fused projection weights [Q*scale ; K ; V], bf16 (resident)
    # o_ref    : (1, d, L)   current batch output, channel-first, f32
    d = d_model
    H = num_head
    dh = d // H

    x = x_ref[0].astype(jnp.bfloat16)          # [d, L]  (cast in-kernel; HBM stays f32)
    w = wqkv_ref[...]                          # [3d, d] bf16
    valid = mask_ref[0] != 0.0                 # [1, L]  broadcasts over query rows

    # Fused Q/K/V projection: one MXU matmul, f32 accumulation.
    # qkv[r, l] = sum_i w[r, i] * x[i, l]
    qkv = lax.dot_general(
        w, x, (((1,), (0,)), ((), ())),
        preferred_element_type=jnp.float32)    # [3d, L]

    outs = []
    # Static unrolled loop over heads (H is small); slices are sublane-aligned (dh mult of 8).
    for h in range(H):
        q_h = qkv[h * dh:(h + 1) * dh, :].astype(jnp.bfloat16)                   # [dh, L]
        k_h = qkv[d + h * dh:d + (h + 1) * dh, :].astype(jnp.bfloat16)           # [dh, L]
        v_h = qkv[2 * d + h * dh:2 * d + (h + 1) * dh, :].astype(jnp.bfloat16)   # [dh, L]

        # logits[q, k] = sum_c q_h[c, q] * k_h[c, k]   (no explicit transposes)
        logits = lax.dot_general(
            q_h, k_h, (((0,), (0,)), ((), ())),
            preferred_element_type=jnp.float32)                                  # [Lq, Lk]
        # NaN-safe masking (exact mask_logits semantics for binary masks).
        logits = jnp.where(valid, logits, -1e30)

        # Softmax over keys in f32; divide via EUP approximate reciprocal.
        logits = logits - jnp.max(logits, axis=-1, keepdims=True)
        e = jnp.exp(logits)
        p = e * pl.reciprocal(jnp.sum(e, axis=-1, keepdims=True), approx=True)
        # TODO(synk): dropout skipped (eval mode / training=False).

        # out_h[c, q] = sum_k v_h[c, k] * p[q, k]  -> channel-first per-head output
        out_h = lax.dot_general(
            v_h, p.astype(jnp.bfloat16), (((1,), (1,)), ((), ())),
            preferred_element_type=jnp.float32)                                  # [dh, Lq]
        outs.append(out_h)

    # Heads concatenated along channels == PyTorch combine_last_two_dim ordering.
    o_ref[...] = jnp.concatenate(outs, axis=0)[None].astype(o_ref.dtype)         # [1, d, L]


def self_attention_forward(queries, mask, w_mem, w_query, *, num_head):
    """queries: [B, d_model, L] (channel-first), mask: [B, L]; returns [B, d_model, L]."""
    B, d, L = queries.shape
    H = num_head
    dh = d // H
    scale = float(dh) ** -0.5

    # Fused, pre-scaled projection weights: rows [Q*scale ; K ; V].  Tiny, bf16, resident.
    w_qkv = jnp.concatenate([w_query * scale, w_mem], axis=0).astype(jnp.bfloat16)  # [3d, d]
    mask3 = mask.reshape(B, 1, L).astype(jnp.float32)
    x = queries.astype(jnp.float32)            # already channel-first: no wrapper transpose

    out = pl.pallas_call(
        functools.partial(_self_attention_kernel, num_head=H, d_model=d),
        out_shape=jax.ShapeDtypeStruct((B, d, L), jnp.float32),
        grid_spec=pltpu.PrefetchScalarGridSpec(
            num_scalar_prefetch=0,
            grid=(B,),
            in_specs=[
                pl.BlockSpec((1, d, L), lambda b: (b, 0, 0)),       # activations
                pl.BlockSpec((1, 1, L), lambda b: (b, 0, 0)),       # mask
                pl.BlockSpec((3 * d, d), lambda b: (0, 0)),         # fused weights (resident)
            ],
            out_specs=pl.BlockSpec((1, d, L), lambda b: (b, 0, 0)),
        ),
        compiler_params=pltpu.CompilerParams(
            dimension_semantics=("parallel",)),
    )(x, mask3, w_qkv)
    return out                                                       # [B, d, L]


def _reference_forward(queries, mask, w_mem, w_query, *, num_head):
    """Pure-JAX f32 reference mirroring the PyTorch forward (eval mode)."""
    B, d, L = queries.shape
    H = num_head
    dh = d // H
    x = jnp.transpose(queries, (0, 2, 1))            # [B, L, d]
    memory = jnp.einsum("bld,od->blo", x, w_mem)     # [B, L, 2d]
    query = jnp.einsum("bld,od->blo", x, w_query)    # [B, L, d]

    def split_heads(t):                              # [B, L, d] -> [B, H, L, dh]
        return jnp.transpose(t.reshape(B, L, H, dh), (0, 2, 1, 3))

    Q = split_heads(query) * (dh ** -0.5)
    K = split_heads(memory[..., :d])
    V = split_heads(memory[..., d:])
    logits = jnp.einsum("bhqd,bhkd->bhqk", Q, K)
    m = mask.astype(jnp.float32).reshape(B, 1, 1, L)
    logits = logits * m + (1.0 - m) * (-1e30)
    w = jax.nn.softmax(logits, axis=-1)
    o = jnp.einsum("bhqk,bhkd->bhqd", w, V)          # [B, H, L, dh]
    o = jnp.transpose(o, (0, 2, 1, 3)).reshape(B, L, d)
    return jnp.transpose(o, (0, 2, 1))               # [B, d, L]


if __name__ == "__main__":
    B, d_model, L, num_head = 2, 32, 16, 4

    key = jax.random.PRNGKey(0)
    k1, k2, k3 = jax.random.split(key, 3)

    # Deterministic synthetic parameters (Conv1d weight [out, in, 1] -> [out, in]).
    w_mem = jax.random.normal(k1, (2 * d_model, d_model), jnp.float32) * 0.1
    w_query = jax.random.normal(k2, (d_model, d_model), jnp.float32) * 0.1

    queries = jax.random.normal(k3, (B, d_model, L), jnp.float32)
    # mask: 1 for valid positions, 0 for padded tail.
    mask = jnp.concatenate(
        [jnp.ones((B, L - 3), jnp.float32), jnp.zeros((B, 3), jnp.float32)], axis=-1)

    out = self_attention_forward(queries, mask, w_mem, w_query, num_head=num_head)
    out = jax.block_until_ready(out)

    ref = _reference_forward(queries, mask, w_mem, w_query, num_head=num_head)
    assert out.shape == (B, d_model, L)
    # bf16 MXU path + approx reciprocal -> loosened tolerance vs f32 reference.
    assert jnp.allclose(out, ref, atol=3e-2, rtol=3e-2), "mismatch vs JAX reference"

    print("KERNEL_OK")
</pallas_src>

<mosaic_0001>
module attributes {stable_mosaic.version = 11 : i64} {
  func.func @_self_attention_kernel(%arg0: i32, %arg1: memref<1x32x16xf32, #tpu.memory_space<vmem>>, %arg2: memref<1x1x16xf32, #tpu.memory_space<vmem>>, %arg3: memref<96x32xbf16, #tpu.memory_space<vmem>>, %arg4: memref<1x32x16xf32, #tpu.memory_space<vmem>>) attributes {dimension_semantics = [#tpu.dimension_semantics<parallel>], iteration_bounds = array<i64: 2>, scalar_prefetch = 0 : i64, scratch_operands = 0 : i64, tpu.core_type = #tpu.core_type<tc>, window_params = [{transform_indices = @transform_0, window_bounds = array<i64: 1, 32, 16>}, {transform_indices = @transform_1, window_bounds = array<i64: 1, 1, 16>}, {pipeline_mode = #tpu.pipeline_mode<synchronous>, transform_indices = @transform_2, window_bounds = array<i64: 96, 32>}, {transform_indices = @transform_3, window_bounds = array<i64: 1, 32, 16>}]} {
    %c0 = arith.constant 0 : index
    %c0_0 = arith.constant 0 : index
    %c0_1 = arith.constant 0 : index
    %0 = vector.load %arg1[%c0, %c0_0, %c0_1] : memref<1x32x16xf32, #tpu.memory_space<vmem>>, vector<1x32x16xf32>
    %1 = vector.shape_cast %0 : vector<1x32x16xf32> to vector<32x16xf32>
    %2 = arith.truncf %1 : vector<32x16xf32> to vector<32x16xbf16>
    %c0_2 = arith.constant 0 : index
    %c0_3 = arith.constant 0 : index
    %3 = vector.load %arg3[%c0_2, %c0_3] : memref<96x32xbf16, #tpu.memory_space<vmem>>, vector<96x32xbf16>
    %c0_4 = arith.constant 0 : index
    %c0_5 = arith.constant 0 : index
    %c0_6 = arith.constant 0 : index
    %4 = vector.load %arg2[%c0_4, %c0_5, %c0_6] : memref<1x1x16xf32, #tpu.memory_space<vmem>>, vector<1x1x16xf32>
    %5 = vector.shape_cast %4 : vector<1x1x16xf32> to vector<1x16xf32>
    %cst = arith.constant 0.000000e+00 : f32
    %6 = vector.broadcast %cst : f32 to vector<1x16xf32>
    %7 = arith.cmpf one, %5, %6 : vector<1x16xf32>
    %cst_7 = arith.constant dense<0.000000e+00> : vector<96x16xf32>
    %8 = tpu.matmul %3, %2, %cst_7 {dimension_numbers = #tpu.dot_dimension_numbers<[1], [0], [0], [1], [0, 0, 1, 1], [], []>} : vector<96x32xbf16>, vector<32x16xbf16>, vector<96x16xf32> -> vector<96x16xf32>
    %9 = vector.extract_strided_slice %8 {offsets = [0, 0], sizes = [8, 16], strides = [1, 1]} : vector<96x16xf32> to vector<8x16xf32>
    %10 = arith.truncf %9 : vector<8x16xf32> to vector<8x16xbf16>
    %11 = vector.extract_strided_slice %8 {offsets = [32, 0], sizes = [8, 16], strides = [1, 1]} : vector<96x16xf32> to vector<8x16xf32>
    %12 = arith.truncf %11 : vector<8x16xf32> to vector<8x16xbf16>
    %13 = vector.extract_strided_slice %8 {offsets = [64, 0], sizes = [8, 16], strides = [1, 1]} : vector<96x16xf32> to vector<8x16xf32>
    %14 = arith.truncf %13 : vector<8x16xf32> to vector<8x16xbf16>
    %cst_8 = arith.constant dense<0.000000e+00> : vector<16x16xf32>
    %15 = tpu.matmul %10, %12, %cst_8 {dimension_numbers = #tpu.dot_dimension_numbers<[0], [0], [1], [1], [0, 1, 1, 1], [], []>} : vector<8x16xbf16>, vector<8x16xbf16>, vector<16x16xf32> -> vector<16x16xf32>
    %cst_9 = arith.constant -1.000000e+30 : f32
    %16 = vector.shape_cast %7 : vector<1x16xi1> to vector<1x16xi1>
    %17 = vector.broadcast %16 : vector<1x16xi1> to vector<16x16xi1>
    %18 = vector.broadcast %cst_9 : f32 to vector<16x16xf32>
    %19 = arith.select %17, %15, %18 : vector<16x16xi1>, vector<16x16xf32>
    %cst_10 = arith.constant dense<0xFF800000> : vector<16xf32>
    %20 = vector.multi_reduction <maximumf>, %19, %cst_10 [1] : vector<16x16xf32> to vector<16xf32>
    %21 = vector.shape_cast %20 : vector<16xf32> to vector<16x1xf32>
    %22 = vector.broadcast %21 : vector<16x1xf32> to vector<16x16xf32>
    %23 = arith.subf %19, %22 : vector<16x16xf32>
    %24 = math.exp %23 : vector<16x16xf32>
    %cst_11 = arith.constant dense<0.000000e+00> : vector<16xf32>
    %25 = vector.multi_reduction <add>, %24, %cst_11 [1] : vector<16x16xf32> to vector<16xf32>
    %26 = vector.shape_cast %25 : vector<16xf32> to vector<16x1xf32>
    %27 = tpu.reciprocal %26 {approx = true} : vector<16x1xf32> -> vector<16x1xf32>
    %28 = vector.broadcast %27 : vector<16x1xf32> to vector<16x16xf32>
    %29 = arith.mulf %24, %28 : vector<16x16xf32>
    %30 = arith.truncf %29 : vector<16x16xf32> to vector<16x16xbf16>
    %cst_12 = arith.constant dense<0.000000e+00> : vector<8x16xf32>
    %31 = tpu.matmul %14, %30, %cst_12 {dimension_numbers = #tpu.dot_dimension_numbers<[1], [1], [0], [0], [0, 0, 1, 0], [], []>} : vector<8x16xbf16>, vector<16x16xbf16>, vector<8x16xf32> -> vector<8x16xf32>
    %32 = vector.extract_strided_slice %8 {offsets = [8, 0], sizes = [8, 16], strides = [1, 1]} : vector<96x16xf32> to vector<8x16xf32>
    %33 = arith.truncf %32 : vector<8x16xf32> to vector<8x16xbf16>
    %34 = vector.extract_strided_slice %8 {offsets = [40, 0], sizes = [8, 16], strides = [1, 1]} : vector<96x16xf32> to vector<8x16xf32>
    %35 = arith.truncf %34 : vector<8x16xf32> to vector<8x16xbf16>
    %36 = vector.extract_strided_slice %8 {offsets = [72, 0], sizes = [8, 16], strides = [1, 1]} : vector<96x16xf32> to vector<8x16xf32>
    %37 = arith.truncf %36 : vector<8x16xf32> to vector<8x16xbf16>
    %cst_13 = arith.constant dense<0.000000e+00> : vector<16x16xf32>
    %38 = tpu.matmul %33, %35, %cst_13 {dimension_numbers = #tpu.dot_dimension_numbers<[0], [0], [1], [1], [0, 1, 1, 1], [], []>} : vector<8x16xbf16>, vector<8x16xbf16>, vector<16x16xf32> -> vector<16x16xf32>
    %cst_14 = arith.constant -1.000000e+30 : f32
    %39 = vector.shape_cast %7 : vector<1x16xi1> to vector<1x16xi1>
    %40 = vector.broadcast %39 : vector<1x16xi1> to vector<16x16xi1>
    %41 = vector.broadcast %cst_14 : f32 to vector<16x16xf32>
    %42 = arith.select %40, %38, %41 : vector<16x16xi1>, vector<16x16xf32>
    %cst_15 = arith.constant dense<0xFF800000> : vector<16xf32>
    %43 = vector.multi_reduction <maximumf>, %42, %cst_15 [1] : vector<16x16xf32> to vector<16xf32>
    %44 = vector.shape_cast %43 : vector<16xf32> to vector<16x1xf32>
    %45 = vector.broadcast %44 : vector<16x1xf32> to vector<16x16xf32>
    %46 = arith.subf %42, %45 : vector<16x16xf32>
    %47 = math.exp %46 : vector<16x16xf32>
    %cst_16 = arith.constant dense<0.000000e+00> : vector<16xf32>
    %48 = vector.multi_reduction <add>, %47, %cst_16 [1] : vector<16x16xf32> to vector<16xf32>
    %49 = vector.shape_cast %48 : vector<16xf32> to vector<16x1xf32>
    %50 = tpu.reciprocal %49 {approx = true} : vector<16x1xf32> -> vector<16x1xf32>
    %51 = vector.broadcast %50 : vector<16x1xf32> to vector<16x16xf32>
    %52 = arith.mulf %47, %51 : vector<16x16xf32>
    %53 = arith.truncf %52 : vector<16x16xf32> to vector<16x16xbf16>
    %cst_17 = arith.constant dense<0.000000e+00> : vector<8x16xf32>
    %54 = tpu.matmul %37, %53, %cst_17 {dimension_numbers = #tpu.dot_dimension_numbers<[1], [1], [0], [0], [0, 0, 1, 0], [], []>} : vector<8x16xbf16>, vector<16x16xbf16>, vector<8x16xf32> -> vector<8x16xf32>
    %55 = vector.extract_strided_slice %8 {offsets = [16, 0], sizes = [8, 16], strides = [1, 1]} : vector<96x16xf32> to vector<8x16xf32>
    %56 = arith.truncf %55 : vector<8x16xf32> to vector<8x16xbf16>
    %57 = vector.extract_strided_slice %8 {offsets = [48, 0], sizes = [8, 16], strides = [1, 1]} : vector<96x16xf32> to vector<8x16xf32>
    %58 = arith.truncf %57 : vector<8x16xf32> to vector<8x16xbf16>
    %59 = vector.extract_strided_slice %8 {offsets = [80, 0], sizes = [8, 16], strides = [1, 1]} : vector<96x16xf32> to vector<8x16xf32>
    %60 = arith.truncf %59 : vector<8x16xf32> to vector<8x16xbf16>
    %cst_18 = arith.constant dense<0.000000e+00> : vector<16x16xf32>
    %61 = tpu.matmul %56, %58, %cst_18 {dimension_numbers = #tpu.dot_dimension_numbers<[0], [0], [1], [1], [0, 1, 1, 1], [], []>} : vector<8x16xbf16>, vector<8x16xbf16>, vector<16x16xf32> -> vector<16x16xf32>
    %cst_19 = arith.constant -1.000000e+30 : f32
    %62 = vector.shape_cast %7 : vector<1x16xi1> to vector<1x16xi1>
    %63 = vector.broadcast %62 : vector<1x16xi1> to vector<16x16xi1>
    %64 = vector.broadcast %cst_19 : f32 to vector<16x16xf32>
    %65 = arith.select %63, %61, %64 : vector<16x16xi1>, vector<16x16xf32>
    %cst_20 = arith.constant dense<0xFF800000> : vector<16xf32>
    %66 = vector.multi_reduction <maximumf>, %65, %cst_20 [1] : vector<16x16xf32> to vector<16xf32>
    %67 = vector.shape_cast %66 : vector<16xf32> to vector<16x1xf32>
    %68 = vector.broadcast %67 : vector<16x1xf32> to vector<16x16xf32>
    %69 = arith.subf %65, %68 : vector<16x16xf32>
    %70 = math.exp %69 : vector<16x16xf32>
    %cst_21 = arith.constant dense<0.000000e+00> : vector<16xf32>
    %71 = vector.multi_reduction <add>, %70, %cst_21 [1] : vector<16x16xf32> to vector<16xf32>
    %72 = vector.shape_cast %71 : vector<16xf32> to vector<16x1xf32>
    %73 = tpu.reciprocal %72 {approx = true} : vector<16x1xf32> -> vector<16x1xf32>
    %74 = vector.broadcast %73 : vector<16x1xf32> to vector<16x16xf32>
    %75 = arith.mulf %70, %74 : vector<16x16xf32>
    %76 = arith.truncf %75 : vector<16x16xf32> to vector<16x16xbf16>
    %cst_22 = arith.constant dense<0.000000e+00> : vector<8x16xf32>
    %77 = tpu.matmul %60, %76, %cst_22 {dimension_numbers = #tpu.dot_dimension_numbers<[1], [1], [0], [0], [0, 0, 1, 0], [], []>} : vector<8x16xbf16>, vector<16x16xbf16>, vector<8x16xf32> -> vector<8x16xf32>
    %78 = vector.extract_strided_slice %8 {offsets = [24, 0], sizes = [8, 16], strides = [1, 1]} : vector<96x16xf32> to vector<8x16xf32>
    %79 = arith.truncf %78 : vector<8x16xf32> to vector<8x16xbf16>
    %80 = vector.extract_strided_slice %8 {offsets = [56, 0], sizes = [8, 16], strides = [1, 1]} : vector<96x16xf32> to vector<8x16xf32>
    %81 = arith.truncf %80 : vector<8x16xf32> to vector<8x16xbf16>
    %82 = vector.extract_strided_slice %8 {offsets = [88, 0], sizes = [8, 16], strides = [1, 1]} : vector<96x16xf32> to vector<8x16xf32>
    %83 = arith.truncf %82 : vector<8x16xf32> to vector<8x16xbf16>
    %cst_23 = arith.constant dense<0.000000e+00> : vector<16x16xf32>
    %84 = tpu.matmul %79, %81, %cst_23 {dimension_numbers = #tpu.dot_dimension_numbers<[0], [0], [1], [1], [0, 1, 1, 1], [], []>} : vector<8x16xbf16>, vector<8x16xbf16>, vector<16x16xf32> -> vector<16x16xf32>
    %cst_24 = arith.constant -1.000000e+30 : f32
    %85 = vector.shape_cast %7 : vector<1x16xi1> to vector<1x16xi1>
    %86 = vector.broadcast %85 : vector<1x16xi1> to vector<16x16xi1>
    %87 = vector.broadcast %cst_24 : f32 to vector<16x16xf32>
    %88 = arith.select %86, %84, %87 : vector<16x16xi1>, vector<16x16xf32>
    %cst_25 = arith.constant dense<0xFF800000> : vector<16xf32>
    %89 = vector.multi_reduction <maximumf>, %88, %cst_25 [1] : vector<16x16xf32> to vector<16xf32>
    %90 = vector.shape_cast %89 : vector<16xf32> to vector<16x1xf32>
    %91 = vector.broadcast %90 : vector<16x1xf32> to vector<16x16xf32>
    %92 = arith.subf %88, %91 : vector<16x16xf32>
    %93 = math.exp %92 : vector<16x16xf32>
    %cst_26 = arith.constant dense<0.000000e+00> : vector<16xf32>
    %94 = vector.multi_reduction <add>, %93, %cst_26 [1] : vector<16x16xf32> to vector<16xf32>
    %95 = vector.shape_cast %94 : vector<16xf32> to vector<16x1xf32>
    %96 = tpu.reciprocal %95 {approx = true} : vector<16x1xf32> -> vector<16x1xf32>
    %97 = vector.broadcast %96 : vector<16x1xf32> to vector<16x16xf32>
    %98 = arith.mulf %93, %97 : vector<16x16xf32>
    %99 = arith.truncf %98 : vector<16x16xf32> to vector<16x16xbf16>
    %cst_27 = arith.constant dense<0.000000e+00> : vector<8x16xf32>
    %100 = tpu.matmul %83, %99, %cst_27 {dimension_numbers = #tpu.dot_dimension_numbers<[1], [1], [0], [0], [0, 0, 1, 0], [], []>} : vector<8x16xbf16>, vector<16x16xbf16>, vector<8x16xf32> -> vector<8x16xf32>
    %101 = tpu.concatenate %31, %54, %77, %100 in 0 : vector<8x16xf32>, vector<8x16xf32>, vector<8x16xf32>, vector<8x16xf32> -> vector<32x16xf32>
    %102 = vector.shape_cast %101 : vector<32x16xf32> to vector<1x32x16xf32>
    %c0_28 = arith.constant 0 : index
    %c0_29 = arith.constant 0 : index
    %c0_30 = arith.constant 0 : index
    %103 = vector.load %arg4[%c0_28, %c0_29, %c0_30] : memref<1x32x16xf32, #tpu.memory_space<vmem>>, vector<1x32x16xf32>
    tpu.vector_store %arg4[%c0_28, %c0_29, %c0_30], %102 {strides = array<i32>} : memref<1x32x16xf32, #tpu.memory_space<vmem>>, vector<1x32x16xf32>,
    return
  }
  func.func @transform_0(%arg0: i32) -> (i32, i32, i32) {
    %c0_i32 = arith.constant 0 : i32
    %c0_i32_0 = arith.constant 0 : i32
    %c0_i32_1 = arith.constant 0 : i32
    return %arg0, %c0_i32, %c0_i32_0 : i32, i32, i32
  }
  func.func @transform_1(%arg0: i32) -> (i32, i32, i32) {
    %c0_i32 = arith.constant 0 : i32
    %c0_i32_0 = arith.constant 0 : i32
    %c0_i32_1 = arith.constant 0 : i32
    return %arg0, %c0_i32, %c0_i32_0 : i32, i32, i32
  }
  func.func @transform_2(%arg0: i32) -> (i32, i32) {
    %c0_i32 = arith.constant 0 : i32
    %c0_i32_0 = arith.constant 0 : i32
    %c0_i32_1 = arith.constant 0 : i32
    return %c0_i32, %c0_i32_0 : i32, i32
  }
  func.func @transform_3(%arg0: i32) -> (i32, i32, i32) {
    %c0_i32 = arith.constant 0 : i32
    %c0_i32_0 = arith.constant 0 : i32
    %c0_i32_1 = arith.constant 0 : i32
    return %arg0, %c0_i32, %c0_i32_0 : i32, i32, i32
  }
}

</mosaic_0001>

<llo_original>
// kernel: tpu_custom_call.1
$region0: #{tpu_custom_call.1}
  #allocation0 [shape = 'u32[]', space=smem, size = 0x4, offset = 0x4, fixed_abs, tag = 'smem constant byte address 0x4 - core index']
  #allocation1 [shape = 'u32[72,128]{1,0:T(1,128)}', space=vmem, size = 0x9000, scoped, tag = 'internal scratch']
  %s0 = inlined_call_operand.vmem [shape: f32[2,32,16], index: 0, kind: input, shape index: {}]
  %s1 = inlined_call_operand.vmem [shape: f32[2,1,16], index: 1, kind: input, shape index: {}]
  %s2 = inlined_call_operand.vmem [shape: bf16[96,32], index: 2, kind: input, shape index: {}]
  %s3 = inlined_call_operand.vmem [shape: f32[2,32,16], index: 3, kind: output, shape index: {}]
  %s4 = sld [smem:[#allocation0]]
  $region45: #{tpu_custom_call.1} parent=0
    _
  %s6 = ssub.s32 1, %s4
  %s7 = scalar_select 0, %s6, %s4
  loop: start=0, step=1, limit=4
  $region2: #{tpu_custom_call.1} parent=0 // loop_pre_header
    _
  $region3: #{tpu_custom_call.1} parent=0 // loop_header
    %s9 = sphi 0, %s13
    %p10 = scmp.ge.s32.totalorder %s9, 4
    %s19 = sphi 0, %s21
    %s22 = sphi 0, %s19
    %s23 = sphi 0, %s22
    %s39 = sphi 0, %s23
    %s45 = sphi 0, %s47
    %s48 = sphi 0, %s45
    %s49 = sphi 0, %s48
    %s65 = sphi 0, %s49
    %s69 = sphi 0, %s69
    %s71 = sphi 0, %s69
    %s72 = sphi 0, %s71
    %s86 = sphi 0, %s72
    %s92 = sphi 0, %s94
    %s95 = sphi 0, %s92
    %s96 = sphi 0, %s95
    %s112 = sphi 0, %s96
  $region4: #{tpu_custom_call.1} parent=0 // loop_header_branch
    %12 = sbr.rel (%p10) target = $region8
  $region5: #{tpu_custom_call.1} parent=0 // loop_body
    %s14 = ssub.s32 %s9, 1
    %s15 = ssub.s32 %s9, 2
    %s16 = sadd.s32 %s9, 1
    %s17 = ssub.s32 %s9, %s16
    %p18 = scmp.eq.s32.totalorder %s17, 0
    %s20 = sadd.s32 %s19, 1
    %s21 = scalar_select %p18, %s19, %s20
    %p24 = pneg %p18
    %p25 = scmp.eq.s32.totalorder %s9, 1
    %p26 = por %p24, %p25
    %p27 = scmp.ne.s32.totalorder %s19, %s22
    %p28 = scmp.eq.s32.totalorder %s9, 0
    %p29 = por %p27, %p28
    %p30 = scmp.ne.s32.totalorder %s19, %s22
    %p31 = scmp.eq.s32.totalorder %s14, 1
    %p32 = por %p30, %p31
    %p33 = scmp.ne.s32.totalorder %s22, %s23
    %p34 = scmp.eq.s32.totalorder %s14, 0
    %p35 = por %p33, %p34
    %p36 = scmp.ne.s32.totalorder %s22, %s23
    %p37 = scmp.eq.s32.totalorder %s15, 1
    %p38 = por %p36, %p37
    %p40 = scmp.ne.s32.totalorder %s23, %s39
    %p41 = scmp.eq.s32.totalorder %s15, 0
    %p42 = por %p40, %p41
    %s43 = ssub.s32 %s9, %s16
    %p44 = scmp.eq.s32.totalorder %s43, 0
    %s46 = sadd.s32 %s45, 1
    %s47 = scalar_select %p44, %s45, %s46
    %p50 = pneg %p44
    %p51 = scmp.eq.s32.totalorder %s9, 1
    %p52 = por %p50, %p51
    %p53 = scmp.ne.s32.totalorder %s45, %s48
    %p54 = scmp.eq.s32.totalorder %s9, 0
    %p55 = por %p53, %p54
    %p56 = scmp.ne.s32.totalorder %s45, %s48
    %p57 = scmp.eq.s32.totalorder %s14, 1
    %p58 = por %p56, %p57
    %p59 = scmp.ne.s32.totalorder %s48, %s49
    %p60 = scmp.eq.s32.totalorder %s14, 0
    %p61 = por %p59, %p60
    %p62 = scmp.ne.s32.totalorder %s48, %s49
    %p63 = scmp.eq.s32.totalorder %s15, 1
    %p64 = por %p62, %p63
    %p66 = scmp.ne.s32.totalorder %s49, %s65
    %p67 = scmp.eq.s32.totalorder %s15, 0
    %p68 = por %p66, %p67
    %s70 = sadd.s32 %s69, 1
    %p73 = scmp.eq.s32.totalorder %s9, 1
    %p74 = scmp.ne.s32.totalorder %s69, %s71
    %p75 = scmp.eq.s32.totalorder %s9, 0
    %p76 = por %p74, %p75
    %p77 = scmp.ne.s32.totalorder %s69, %s71
    %p78 = scmp.eq.s32.totalorder %s14, 1
    %p79 = por %p77, %p78
    %p80 = scmp.ne.s32.totalorder %s71, %s72
    %p81 = scmp.eq.s32.totalorder %s14, 0
    %p82 = por %p80, %p81
    %p83 = scmp.ne.s32.totalorder %s71, %s72
    %p84 = scmp.eq.s32.totalorder %s15, 1
    %p85 = por %p83, %p84
    %p87 = scmp.ne.s32.totalorder %s72, %s86
    %p88 = scmp.eq.s32.totalorder %s15, 0
    %p89 = por %p87, %p88
    %s90 = ssub.s32 %s9, %s16
    %p91 = scmp.eq.s32.totalorder %s90, 0
    %s93 = sadd.s32 %s92, 1
    %s94 = scalar_select %p91, %s92, %s93
    %p97 = pneg %p91
    %p98 = scmp.eq.s32.totalorder %s9, 1
    %p99 = por %p97, %p98
    %p100 = scmp.ne.s32.totalorder %s92, %s95
    %p101 = scmp.eq.s32.totalorder %s9, 0
    %p102 = por %p100, %p101
    %p103 = scmp.ne.s32.totalorder %s92, %s95
    %p104 = scmp.eq.s32.totalorder %s14, 1
    %p105 = por %p103, %p104
    %p106 = scmp.ne.s32.totalorder %s95, %s96
    %p107 = scmp.eq.s32.totalorder %s14, 0
    %p108 = por %p106, %p107
    %p109 = scmp.ne.s32.totalorder %s95, %s96
    %p110 = scmp.eq.s32.totalorder %s15, 1
    %p111 = por %p109, %p110
    %p113 = scmp.ne.s32.totalorder %s96, %s112
    %p114 = scmp.eq.s32.totalorder %s15, 0
    %p115 = por %p113, %p114
    %p116 = scmp.le.s32.totalorder 1, %s9
    %p117 = scmp.lt.s32.totalorder %s9, 3
    %p118 = pnand %p116, %p117
    %p119 = pneg %p118
    // Predicated region
    $region9: #{tpu_custom_call.1} parent=5 // pred_check
      _
    $region10: #{tpu_custom_call.1} parent=5 // pred_check_branch
      %121 = sbr.rel (%p118) target = $region12
    $region11: #{tpu_custom_call.1} parent=5 // pred_region
      %s122 = ssub.s32 %s9, 1
      // Predicated region
      $region13: #{tpu_custom_call.1} parent=11 // pred_check
        %p123 = pneg %p82
      $region14: #{tpu_custom_call.1} parent=11 // pred_check_branch
        %125 = sbr.rel (%p123) target = $region16
      $region15: #{tpu_custom_call.1} parent=11 // pred_region
        _
      $region16: #{tpu_custom_call.1} parent=11 // pred_fallthru
        _
    $region12: #{tpu_custom_call.1} parent=5 // pred_fallthru
      _
    %p126 = scmp.lt.s32.totalorder %s9, 2
    // Predicated region
    $region17: #{tpu_custom_call.1} parent=5 // pred_check
      %p127 = pneg %p126
    $region18: #{tpu_custom_call.1} parent=5 // pred_check_branch
      %129 = sbr.rel (%p127) target = $region20
    $region19: #{tpu_custom_call.1} parent=5 // pred_region
      // Predicated region
      $region21: #{tpu_custom_call.1} parent=19 // pred_check
        %p130 = pneg %p29
      $region22: #{tpu_custom_call.1} parent=19 // pred_check_branch
        %132 = sbr.rel (%p130) target = $region24
      $region23: #{tpu_custom_call.1} parent=19 // pred_region
        %p133 = scmp.lt.s32.totalorder %s9, 1
        %s134 = scalar_select %p133, %s9, 1
        %s135 = smul.addr %s134, 4
        %s136 = smul.addr %s135, 8
        %s137 = scalar_lea.vmem %s0, %s136
      $region24: #{tpu_custom_call.1} parent=19 // pred_fallthru
        _
      // Predicated region
      $region25: #{tpu_custom_call.1} parent=19 // pred_check
        %p138 = pneg %p55
      $region26: #{tpu_custom_call.1} parent=19 // pred_check_branch
        %140 = sbr.rel (%p138) target = $region28
      $region27: #{tpu_custom_call.1} parent=19 // pred_region
        %p141 = scmp.lt.s32.totalorder %s9, 1
        %s142 = scalar_select %p141, %s9, 1
        %s143 = scalar_lea.vmem %s1, %s142
      $region28: #{tpu_custom_call.1} parent=19 // pred_fallthru
        _
    $region20: #{tpu_custom_call.1} parent=5 // pred_fallthru
      _
    %p144 = scmp.le.s32.totalorder 1, %s9
    %p145 = scmp.lt.s32.totalorder %s9, 3
    %p146 = pnand %p144, %p145
    %p147 = pneg %p146
    // Predicated region
    $region29: #{tpu_custom_call.1} parent=5 // pred_check
      _
    $region30: #{tpu_custom_call.1} parent=5 // pred_check_branch
      %149 = sbr.rel (%p146) target = $region32
    $region31: #{tpu_custom_call.1} parent=5 // pred_region
      %s150 = ssub.s32 %s9, 1
      %p151 = scmp.lt.s32.totalorder %s14, 1
      %s152 = scalar_select %p151, %s14, 1
      %s153 = smul.addr %s152, 4
      %s154 = smul.addr %s153, 8
      %s155 = scalar_lea.vmem %s0, %s154
      %p156 = pneg %p35
      %p157 = pneg %p32
      %p158 = scmp.lt.s32.totalorder %s14, 1
      %s159 = scalar_select %p158, %s14, 1
      %s160 = scalar_lea.vmem %s1, %s159
      %p161 = pneg %p61
      %p162 = pneg %p58
      %p163 = pneg %p82
      %p164 = pneg %p79
      %p165 = pneg %p108
      %p166 = pneg %p105
      %p167 = scmp.lt.s32.totalorder %s14, 1
      %s168 = scalar_select %p167, %s14, 1
      %s169 = smul.addr %s168, 4
      %s170 = smul.addr %s169, 8
      %s171 = scalar_lea.vmem %s3, %s170
      %p172 = scmp.lt.s32.totalorder %s14, 1
      %s173 = scalar_select %p172, %s14, 1
      %s174 = smul.addr %s173, 4
      %s175 = smul.addr %s174, 8
      %s176 = scalar_lea.vmem %s0, %s175
      %p177 = scmp.lt.s32.totalorder %s14, 1
      %s178 = scalar_select %p177, %s14, 1
      %s179 = scalar_lea.vmem %s1, %s178
      %p180 = scmp.lt.s32.totalorder %s14, 1
      %s181 = scalar_select %p180, %s14, 1
      %s182 = smul.addr %s181, 4
      %s183 = smul.addr %s182, 8
      %s184 = scalar_lea.vmem %s3, %s183
      %v186 = vld [vmem:[%s176] sm:$0xff]
      %v187 = vld [vmem:[%s176 + $0x8] sm:$0xff]
      %v188 = vld [vmem:[%s176 + $0x10] sm:$0xff]
      %v189 = vld [vmem:[%s176 + $0x18] sm:$0xff]
      %v190 = vpack.c.bf16 %v187, %v186
      %v191 = vpack.c.bf16 %v189, %v188
      %v192 = vld [vmem:[%s2] sm:$0xf]
      %v193 = vld [vmem:[%s2 + $0x4] sm:$0xf]
      %v194 = vld [vmem:[%s2 + $0x8] sm:$0xf]
      %v195 = vld [vmem:[%s2 + $0xc] sm:$0xf]
      %v196 = vld [vmem:[%s2 + $0x10] sm:$0xf]
      %v197 = vld [vmem:[%s2 + $0x14] sm:$0xf]
      %v198 = vld [vmem:[%s2 + $0x18] sm:$0xf]
      %v199 = vld [vmem:[%s2 + $0x1c] sm:$0xf]
      %v200 = vld [vmem:[%s2 + $0x20] sm:$0xf]
      %v201 = vld [vmem:[%s2 + $0x24] sm:$0xf]
      %v202 = vld [vmem:[%s2 + $0x28] sm:$0xf]
      %v203 = vld [vmem:[%s2 + $0x2c] sm:$0xf]
      %v204 = vld [vmem:[%s179] sm:$0x1]
      %vm205 = vcmp.ne.f32.partialorder %v204, 0.0
      %v218 = vunpack.c.l.b16 %v192
      %v219 = vunpack.c.l.b16 %v193
      %v220 = vunpack.c.l.b16 %v194
      %v221 = vunpack.c.l.b16 %v195
      %v222 = vunpack.c.l.b16 %v196
      %v223 = vunpack.c.l.b16 %v197
      %v224 = vunpack.c.l.b16 %v198
      %v225 = vunpack.c.l.b16 %v199
      %v226 = vunpack.c.l.b16 %v200
      %v227 = vunpack.c.l.b16 %v201
      %v228 = vunpack.c.l.b16 %v202
      %v229 = vunpack.c.l.b16 %v203
      %v230 = vpack.c.b16 %v219, %v218
      %v231 = vpack.c.b16 %v221, %v220
      %v232 = vpack.c.b16 %v223, %v222
      %v233 = vpack.c.b16 %v225, %v224
      %v234 = vpack.c.b16 %v227, %v226
      %v235 = vpack.c.b16 %v229, %v228
      %vm236 = vcmask 261120
      %v238 = vsel %vm236, %v230, 0
      %v241 = vsel %vm236, %v231, 0
      %v244 = vsel %vm236, %v232, 0
      %v247 = vsel %vm236, %v233, 0
      %v250 = vsel %vm236, %v234, 0
      %v253 = vsel %vm236, %v235, 0
      %255 = vmatpush.bf16.msra.mxu0 0
      %256 = vmatpush.bf16.msra.mxu0 0
      %257 = vmatpush.bf16.msra.mxu0 0
      %258 = vmatpush.bf16.msra.mxu0 0
      %259 = vmatpush.bf16.msra.mxu0 0
      %260 = vmatpush.bf16.msra.mxu0 0
      %261 = vmatpush.bf16.msra.mxu0 %v191
      %262 = vmatpush.bf16.msra.mxu0 %v190
      %263 = vmatmul.bf16.gmra.mxu0 %v238
      %v264 = vpop.f32.mrf.mxu0
      %v265 = vadd.f32 0.0, %v264
      %v266 = vpop.f32.mrf.mxu0
      %v267 = vadd.f32 0.0, %v266
      %268 = vmatmul.bf16.gmra.mxu0 %v241
      %v269 = vpop.f32.mrf.mxu0
      %v270 = vadd.f32 0.0, %v269
      %v271 = vpop.f32.mrf.mxu0
      %v272 = vadd.f32 0.0, %v271
      %273 = vmatmul.bf16.gmra.mxu0 %v244
      %v274 = vpop.f32.mrf.mxu0
      %v275 = vadd.f32 0.0, %v274
      %v276 = vpop.f32.mrf.mxu0
      %v277 = vadd.f32 0.0, %v276
      %278 = vmatmul.bf16.gmra.mxu0 %v247
      %v279 = vpop.f32.mrf.mxu0
      %v280 = vadd.f32 0.0, %v279
      %v281 = vpop.f32.mrf.mxu0
      %v282 = vadd.f32 0.0, %v281
      %283 = vmatmul.bf16.gmra.mxu0 %v250
      %v284 = vpop.f32.mrf.mxu0
      %v285 = vadd.f32 0.0, %v284
      %v286 = vpop.f32.mrf.mxu0
      %v287 = vadd.f32 0.0, %v286
      %288 = vmatmul.bf16.gmra.mxu0 %v253
      %v289 = vpop.f32.mrf.mxu0
      %v290 = vadd.f32 0.0, %v289
      %v291 = vpop.f32.mrf.mxu0
      %v292 = vadd.f32 0.0, %v291
      %293 = vdwg.mxu0
      %v294 = vpack.c.bf16 %v265, %v265
      %v295 = vpack.c.bf16 %v275, %v275
      %v296 = vpack.c.bf16 %v285, %v285
      %297 = vxpose.xlu0.c.b16.start [1/8] %v294, 128
      %298 = vxpose.xlu0.c.b16.cont [2/8] 0, 128
      %299 = vxpose.xlu0.c.b16.cont [3/8] 0, 128
      %300 = vxpose.xlu0.c.b16.cont [4/8] 0, 128
      %301 = vxpose.xlu0.c.b16.cont [5/8] 0, 128
      %302 = vxpose.xlu0.c.b16.cont [6/8] 0, 128
      %303 = vxpose.xlu0.c.b16.cont [7/8] 0, 128
      %304 = vxpose.xlu0.c.b16.end [8/8] 0, 128
      %v305 = vpop.trf.xlu0
      %v306 = vpop.trf.xlu0
      %v307 = vpop.trf.xlu0
      %v308 = vpop.trf.xlu0
      %v309 = vpop.trf.xlu0
      %v310 = vpop.trf.xlu0
      %v311 = vpop.trf.xlu0
      %v312 = vpop.trf.xlu0
      %vm313 = vcmask 64512
      %v315 = vsel %vm313, %v305, 0
      %vm317 = vcmask 1043456
      %v319 = vsel %vm317, %v295, 0
      %321 = vmatpush.bf16.msra.mxu0 0
      %322 = vmatpush.bf16.msra.mxu0 0
      %323 = vmatpush.bf16.msra.mxu0 0
      %324 = vmatpush.bf16.msra.mxu0 0
      %325 = vmatpush.bf16.msra.mxu0 0
      %326 = vmatpush.bf16.msra.mxu0 0
      %327 = vmatpush.bf16.msra.mxu0 0
      %328 = vmatpush.bf16.msra.mxu0 %v319
      %329 = vmatmul.bf16.gmra.mxu0 %v315
      %v330 = vpop.f32.mrf.mxu0
      %v331 = vadd.f32 0.0, %v330
      %v332 = vpop.f32.mrf.mxu0
      %v333 = vadd.f32 0.0, %v332
      %334 = vdwg.mxu0
      %v335 = vsel %vm205, 1, 0
      %v336 = vperm.slane %v335, 0
      %vm337 = vcmp.eq.s32.totalorder %v336, 1
      %v338 = vsel %vm337, %v331, -1e+30
      %v339 = vsel %vm337, %v333, -1e+30
      %vm340 = vcmask 130048
      %v341 = vsel %vm340, %v338, -inf
      %342 = vmax.xlane.f32.xlu0 %v341
      %v343 = vpop.xlane.xlu0 %342
      %v344 = vsel %vm340, %v339, -inf
      %345 = vmax.xlane.f32.xlu0 %v344
      %v346 = vpop.xlane.xlu0 %345
      %v347 = vsub.f32 %v338, %v343
      %v348 = vsub.f32 %v339, %v346
      %v349 = vmul.f32 %v347, 1.442695
      %v350 = vpow.pop %v349
      %v351 = vmul.f32 %v348, 1.442695
      %v352 = vpow.pop %v351
      %v353 = vsel %vm340, %v350, 0.0
      %354 = vadd.xlane.f32.xlu0 %v353
      %v355 = vpop.xlane.xlu0 %354
      %v356 = vsel %vm340, %v352, 0.0
      %357 = vadd.xlane.f32.xlu0 %v356
      %v358 = vpop.xlane.xlu0 %357
      %v359 = vrcp.pop %v355
      %v360 = vrcp.pop %v358
      %v361 = vmul.f32 %v350, %v359
      %v362 = vmul.f32 %v352, %v360
      %v363 = vpack.c.bf16 %v362, %v361
      %v365 = vsel %vm340, %v296, 0
      %v368 = vsel %vm340, %v363, 0
      %370 = vmatpush.bf16.xpose.msra.mxu0 0
      %371 = vmatpush.bf16.xpose.msra.mxu0 0
      %372 = vmatpush.bf16.xpose.msra.mxu0 0
      %373 = vmatpush.bf16.xpose.msra.mxu0 0
      %374 = vmatpush.bf16.xpose.msra.mxu0 0
      %375 = vmatpush.bf16.xpose.msra.mxu0 0
      %376 = vmatpush.bf16.xpose.msra.mxu0 0
      %377 = vmatpush.bf16.xpose.msra.mxu0 %v368
      %378 = vmatmul.bf16.gmra.mxu0 %v365
      %v379 = vpop.f32.mrf.mxu0
      %v380 = vadd.f32 0.0, %v379
      %v381 = vpop.f32.mrf.mxu0
      %382 = vdwg.mxu0
      %v383 = vpack.c.bf16 %v267, %v267
      %v384 = vpack.c.bf16 %v277, %v277
      %v385 = vpack.c.bf16 %v287, %v287
      %386 = vxpose.xlu0.c.b16.start [1/8] %v383, 128
      %387 = vxpose.xlu0.c.b16.cont [2/8] 0, 128
      %388 = vxpose.xlu0.c.b16.cont [3/8] 0, 128
      %389 = vxpose.xlu0.c.b16.cont [4/8] 0, 128
      %390 = vxpose.xlu0.c.b16.cont [5/8] 0, 128
      %391 = vxpose.xlu0.c.b16.cont [6/8] 0, 128
      %392 = vxpose.xlu0.c.b16.cont [7/8] 0, 128
      %393 = vxpose.xlu0.c.b16.end [8/8] 0, 128
      %v394 = vpop.trf.xlu0
      %v395 = vpop.trf.xlu0
      %v396 = vpop.trf.xlu0
      %v397 = vpop.trf.xlu0
      %v398 = vpop.trf.xlu0
      %v399 = vpop.trf.xlu0
      %v400 = vpop.trf.xlu0
      %v401 = vpop.trf.xlu0
      %v403 = vsel %vm313, %v394, 0
      %v406 = vsel %vm317, %v384, 0
      %408 = vmatpush.bf16.msra.mxu0 0
      %409 = vmatpush.bf16.msra.mxu0 0
      %410 = vmatpush.bf16.msra.mxu0 0
      %411 = vmatpush.bf16.msra.mxu0 0
      %412 = vmatpush.bf16.msra.mxu0 0
      %413 = vmatpush.bf16.msra.mxu0 0
      %414 = vmatpush.bf16.msra.mxu0 0
      %415 = vmatpush.bf16.msra.mxu0 %v406
      %416 = vmatmul.bf16.gmra.mxu0 %v403
      %v417 = vpop.f32.mrf.mxu0
      %v418 = vadd.f32 0.0, %v417
      %v419 = vpop.f32.mrf.mxu0
      %v420 = vadd.f32 0.0, %v419
      %421 = vdwg.mxu0
      %v422 = vsel %vm337, %v418, -1e+30
      %v423 = vsel %vm337, %v420, -1e+30
      %v424 = vsel %vm340, %v422, -inf
      %425 = vmax.xlane.f32.xlu0 %v424
      %v426 = vpop.xlane.xlu0 %425
      %v427 = vsel %vm340, %v423, -inf
      %428 = vmax.xlane.f32.xlu0 %v427
      %v429 = vpop.xlane.xlu0 %428
      %v430 = vsub.f32 %v422, %v426
      %v431 = vsub.f32 %v423, %v429
      %v432 = vmul.f32 %v430, 1.442695
      %v433 = vpow.pop %v432
      %v434 = vmul.f32 %v431, 1.442695
      %v435 = vpow.pop %v434
      %v436 = vsel %vm340, %v433, 0.0
      %437 = vadd.xlane.f32.xlu0 %v436
      %v438 = vpop.xlane.xlu0 %437
      %v439 = vsel %vm340, %v435, 0.0
      %440 = vadd.xlane.f32.xlu0 %v439
      %v441 = vpop.xlane.xlu0 %440
      %v442 = vrcp.pop %v438
      %v443 = vrcp.pop %v441
      %v444 = vmul.f32 %v433, %v442
      %v445 = vmul.f32 %v435, %v443
      %v446 = vpack.c.bf16 %v445, %v444
      %v448 = vsel %vm340, %v385, 0
      %v451 = vsel %vm340, %v446, 0
      %453 = vmatpush.bf16.xpose.msra.mxu0 0
      %454 = vmatpush.bf16.xpose.msra.mxu0 0
      %455 = vmatpush.bf16.xpose.msra.mxu0 0
      %456 = vmatpush.bf16.xpose.msra.mxu0 0
      %457 = vmatpush.bf16.xpose.msra.mxu0 0
      %458 = vmatpush.bf16.xpose.msra.mxu0 0
      %459 = vmatpush.bf16.xpose.msra.mxu0 0
      %460 = vmatpush.bf16.xpose.msra.mxu0 %v451
      %461 = vmatmul.bf16.gmra.mxu0 %v448
      %v462 = vpop.f32.mrf.mxu0
      %v463 = vadd.f32 0.0, %v462
      %v464 = vpop.f32.mrf.mxu0
      %465 = vdwg.mxu0
      %v466 = vpack.c.bf16 %v270, %v270
      %v467 = vpack.c.bf16 %v280, %v280
      %v468 = vpack.c.bf16 %v290, %v290
      %469 = vxpose.xlu0.c.b16.start [1/8] %v466, 128
      %470 = vxpose.xlu0.c.b16.cont [2/8] 0, 128
      %471 = vxpose.xlu0.c.b16.cont [3/8] 0, 128
      %472 = vxpose.xlu0.c.b16.cont [4/8] 0, 128
      %473 = vxpose.xlu0.c.b16.cont [5/8] 0, 128
      %474 = vxpose.xlu0.c.b16.cont [6/8] 0, 128
      %475 = vxpose.xlu0.c.b16.cont [7/8] 0, 128
      %476 = vxpose.xlu0.c.b16.end [8/8] 0, 128
      %v477 = vpop.trf.xlu0
      %v478 = vpop.trf.xlu0
      %v479 = vpop.trf.xlu0
      %v480 = vpop.trf.xlu0
      %v481 = vpop.trf.xlu0
      %v482 = vpop.trf.xlu0
      %v483 = vpop.trf.xlu0
      %v484 = vpop.trf.xlu0
      %v486 = vsel %vm313, %v477, 0
      %v489 = vsel %vm317, %v467, 0
      %491 = vmatpush.bf16.msra.mxu0 0
      %492 = vmatpush.bf16.msra.mxu0 0
      %493 = vmatpush.bf16.msra.mxu0 0
      %494 = vmatpush.bf16.msra.mxu0 0
      %495 = vmatpush.bf16.msra.mxu0 0
      %496 = vmatpush.bf16.msra.mxu0 0
      %497 = vmatpush.bf16.msra.mxu0 0
      %498 = vmatpush.bf16.msra.mxu0 %v489
      %499 = vmatmul.bf16.gmra.mxu0 %v486
      %v500 = vpop.f32.mrf.mxu0
      %v501 = vadd.f32 0.0, %v500
      %v502 = vpop.f32.mrf.mxu0
      %v503 = vadd.f32 0.0, %v502
      %504 = vdwg.mxu0
      %v505 = vsel %vm337, %v501, -1e+30
      %v506 = vsel %vm337, %v503, -1e+30
      %v507 = vsel %vm340, %v505, -inf
      %508 = vmax.xlane.f32.xlu0 %v507
      %v509 = vpop.xlane.xlu0 %508
      %v510 = vsel %vm340, %v506, -inf
      %511 = vmax.xlane.f32.xlu0 %v510
      %v512 = vpop.xlane.xlu0 %511
      %v513 = vsub.f32 %v505, %v509
      %v514 = vsub.f32 %v506, %v512
      %v515 = vmul.f32 %v513, 1.442695
      %v516 = vpow.pop %v515
      %v517 = vmul.f32 %v514, 1.442695
      %v518 = vpow.pop %v517
      %v519 = vsel %vm340, %v516, 0.0
      %520 = vadd.xlane.f32.xlu0 %v519
      %v521 = vpop.xlane.xlu0 %520
      %v522 = vsel %vm340, %v518, 0.0
      %523 = vadd.xlane.f32.xlu0 %v522
      %v524 = vpop.xlane.xlu0 %523
      %v525 = vrcp.pop %v521
      %v526 = vrcp.pop %v524
      %v527 = vmul.f32 %v516, %v525
      %v528 = vmul.f32 %v518, %v526
      %v529 = vpack.c.bf16 %v528, %v527
      %v531 = vsel %vm340, %v468, 0
      %v534 = vsel %vm340, %v529, 0
      %536 = vmatpush.bf16.xpose.msra.mxu0 0
      %537 = vmatpush.bf16.xpose.msra.mxu0 0
      %538 = vmatpush.bf16.xpose.msra.mxu0 0
      %539 = vmatpush.bf16.xpose.msra.mxu0 0
      %540 = vmatpush.bf16.xpose.msra.mxu0 0
      %541 = vmatpush.bf16.xpose.msra.mxu0 0
      %542 = vmatpush.bf16.xpose.msra.mxu0 0
      %543 = vmatpush.bf16.xpose.msra.mxu0 %v534
      %544 = vmatmul.bf16.gmra.mxu0 %v531
      %v545 = vpop.f32.mrf.mxu0
      %v546 = vadd.f32 0.0, %v545
      %v547 = vpop.f32.mrf.mxu0
      %548 = vdwg.mxu0
      %v549 = vpack.c.bf16 %v272, %v272
      %v550 = vpack.c.bf16 %v282, %v282
      %v551 = vpack.c.bf16 %v292, %v292
      %552 = vxpose.xlu0.c.b16.start [1/8] %v549, 128
      %553 = vxpose.xlu0.c.b16.cont [2/8] 0, 128
      %554 = vxpose.xlu0.c.b16.cont [3/8] 0, 128
      %555 = vxpose.xlu0.c.b16.cont [4/8] 0, 128
      %556 = vxpose.xlu0.c.b16.cont [5/8] 0, 128
      %557 = vxpose.xlu0.c.b16.cont [6/8] 0, 128
      %558 = vxpose.xlu0.c.b16.cont [7/8] 0, 128
      %559 = vxpose.xlu0.c.b16.end [8/8] 0, 128
      %v560 = vpop.trf.xlu0
      %v561 = vpop.trf.xlu0
      %v562 = vpop.trf.xlu0
      %v563 = vpop.trf.xlu0
      %v564 = vpop.trf.xlu0
      %v565 = vpop.trf.xlu0
      %v566 = vpop.trf.xlu0
      %v567 = vpop.trf.xlu0
      %v569 = vsel %vm313, %v560, 0
      %v572 = vsel %vm317, %v550, 0
      %574 = vmatpush.bf16.msra.mxu0 0
      %575 = vmatpush.bf16.msra.mxu0 0
      %576 = vmatpush.bf16.msra.mxu0 0
      %577 = vmatpush.bf16.msra.mxu0 0
      %578 = vmatpush.bf16.msra.mxu0 0
      %579 = vmatpush.bf16.msra.mxu0 0
      %580 = vmatpush.bf16.msra.mxu0 0
      %581 = vmatpush.bf16.msra.mxu0 %v572
      %582 = vmatmul.bf16.gmra.mxu0 %v569
      %v583 = vpop.f32.mrf.mxu0
      %v584 = vadd.f32 0.0, %v583
      %v585 = vpop.f32.mrf.mxu0
      %v586 = vadd.f32 0.0, %v585
      %587 = vdwg.mxu0
      %v588 = vsel %vm337, %v584, -1e+30
      %v589 = vsel %vm337, %v586, -1e+30
      %v590 = vsel %vm340, %v588, -inf
      %591 = vmax.xlane.f32.xlu0 %v590
      %v592 = vpop.xlane.xlu0 %591
      %v593 = vsel %vm340, %v589, -inf
      %594 = vmax.xlane.f32.xlu0 %v593
      %v595 = vpop.xlane.xlu0 %594
      %v596 = vsub.f32 %v588, %v592
      %v597 = vsub.f32 %v589, %v595
      %v598 = vmul.f32 %v596, 1.442695
      %v599 = vpow.pop %v598
      %v600 = vmul.f32 %v597, 1.442695
      %v601 = vpow.pop %v600
      %v602 = vsel %vm340, %v599, 0.0
      %603 = vadd.xlane.f32.xlu0 %v602
      %v604 = vpop.xlane.xlu0 %603
      %v605 = vsel %vm340, %v601, 0.0
      %606 = vadd.xlane.f32.xlu0 %v605
      %v607 = vpop.xlane.xlu0 %606
      %v608 = vrcp.pop %v604
      %v609 = vrcp.pop %v607
      %v610 = vmul.f32 %v599, %v608
      %v611 = vmul.f32 %v601, %v609
      %v612 = vpack.c.bf16 %v611, %v610
      %v614 = vsel %vm340, %v551, 0
      %v617 = vsel %vm340, %v612, 0
      %619 = vmatpush.bf16.xpose.msra.mxu0 0
      %620 = vmatpush.bf16.xpose.msra.mxu0 0
      %621 = vmatpush.bf16.xpose.msra.mxu0 0
      %622 = vmatpush.bf16.xpose.msra.mxu0 0
      %623 = vmatpush.bf16.xpose.msra.mxu0 0
      %624 = vmatpush.bf16.xpose.msra.mxu0 0
      %625 = vmatpush.bf16.xpose.msra.mxu0 0
      %626 = vmatpush.bf16.xpose.msra.mxu0 %v617
      %627 = vmatmul.bf16.gmra.mxu0 %v614
      %v628 = vpop.f32.mrf.mxu0
      %v629 = vadd.f32 0.0, %v628
      %v630 = vpop.f32.mrf.mxu0
      %631 = vdwg.mxu0
      %632 = vst.msk [vmem:[%s184] sm:$0xff] %vm340, %v380
      %633 = vst.msk [vmem:[%s184 + $0x8] sm:$0xff] %vm340, %v463
      %634 = vst.msk [vmem:[%s184 + $0x10] sm:$0xff] %vm340, %v546
      %635 = vst.msk [vmem:[%s184 + $0x18] sm:$0xff] %vm340, %v629
      %p636 = scmp.lt.s32.totalorder %s14, 1
      %s637 = scalar_select %p636, %s14, 1
      %s638 = smul.addr %s637, 4
      %s639 = smul.addr %s638, 8
      %s640 = scalar_lea.vmem %s3, %s639
      // Predicated region
      $region33: #{tpu_custom_call.1} parent=31 // pred_check
        %p641 = pneg %p105
      $region34: #{tpu_custom_call.1} parent=31 // pred_check_branch
        %643 = sbr.rel (%p641) target = $region36
      $region35: #{tpu_custom_call.1} parent=31 // pred_region
        _
      $region36: #{tpu_custom_call.1} parent=31 // pred_fallthru
        _
    $region32: #{tpu_custom_call.1} parent=5 // pred_fallthru
      _
    %p644 = scmp.le.s32.totalorder 2, %s9
    // Predicated region
    $region37: #{tpu_custom_call.1} parent=5 // pred_check
      %p645 = pneg %p644
    $region38: #{tpu_custom_call.1} parent=5 // pred_check_branch
      %647 = sbr.rel (%p645) target = $region40
    $region39: #{tpu_custom_call.1} parent=5 // pred_region
      %s648 = ssub.s32 %s9, 2
      // Predicated region
      $region41: #{tpu_custom_call.1} parent=39 // pred_check
        %p649 = pneg %p111
      $region42: #{tpu_custom_call.1} parent=39 // pred_check_branch
        %651 = sbr.rel (%p649) target = $region44
      $region43: #{tpu_custom_call.1} parent=39 // pred_region
        %p652 = scmp.lt.s32.totalorder %s15, 1
        %s653 = scalar_select %p652, %s15, 1
        %s654 = smul.addr %s653, 4
        %s655 = smul.addr %s654, 8
        %s656 = scalar_lea.vmem %s3, %s655
      $region44: #{tpu_custom_call.1} parent=39 // pred_fallthru
        _
    $region40: #{tpu_custom_call.1} parent=5 // pred_fallthru
      _
  $region6: #{tpu_custom_call.1} parent=0 // loop_footer
    %s13 = sadd.s32 1, %s9
  $region7: #{tpu_custom_call.1} parent=0 // loop_footer_branch
    %8 = sbr.rel target = $region3
  $region8: #{tpu_custom_call.1} parent=0 // loop_exit
    _

</llo_original>
